<compile_context>
chip_gen: v5e
topology: v5e:2x2
jax: 0.10.0
libtpu: 0.0.40
codegen_flags: <defaults>
</compile_context>

<pallas_src>
import jax
import jax.numpy as jnp
from jax.experimental import pallas as pl
from jax.experimental.pallas import tpu as pltpu

INPUT_DIM = 99
K_PAD = 128           # contraction dim padded to the lane-tile boundary (in-kernel)
HIDDEN = 64
SEQ = 8
HEAD1 = 32
OUT_DIM = 3


def simple_lstm_kernel(x_ref, wih_t_ref, whhb_ref, head_ref, out_ref, xpad_ref):
    # x_ref:     (SEQ, 99)   f32
    # wih_t_ref: (128, 256)  bf16  W_ih^T, rows 99..127 zero; gate order [i,f,g,o];
    #                              g-gate columns pre-scaled by 2
    # whhb_ref:  (65, 256)   bf16  rows 0:64 = W_hh^T (g cols x2), row 64 = b_ih+b_hh (g x2)
    # head_ref:  (97, 32)    f32   rows 0:64 = W1^T, rows 64:96 = W2^T (lane-padded),
    #                              row 96 = b2 (lane-padded)
    # out_ref:   (1, 3)      f32
    # xpad_ref:  (SEQ, 128)  f32   scratch for the in-kernel contraction pad
    H = HIDDEN

    # ---- in-kernel pad of the contraction dim 99 -> 128 (no wrapper-side XLA pad) ----
    xpad_ref[...] = jnp.zeros((SEQ, K_PAD), jnp.float32)
    xpad_ref[:, 0:INPUT_DIM] = x_ref[...]
    x = xpad_ref[...].astype(jnp.bfloat16)                           # (8, 128) bf16

    wih_t = wih_t_ref[...]                                           # (128, 256) bf16
    whh_t = whhb_ref[0:H, :]                                         # (64, 256)  bf16
    bias = whhb_ref[H:H + 1, :].astype(jnp.float32)                  # (1, 256)   f32

    # Input->hidden contribution for all 8 timesteps in one bf16 MXU pass.
    gates_x = jnp.dot(x, wih_t, preferred_element_type=jnp.float32) + bias   # (8,256) f32

    def activations(g):
        # One sigmoid over the full 256-lane gate row: 2 EUP exp pushes + 2 EUP
        # approx-reciprocal pushes.  The g gate is recovered as tanh(z) = 2*sigmoid(2z)-1
        # on the VPU (its weight/bias columns were pre-scaled by 2), so the separate
        # tanh(g) EUP push is eliminated.
        sig = pl.reciprocal(1.0 + jnp.exp(-g), approx=True)
        i_g = sig[:, 0 * H:1 * H]
        f_g = sig[:, 1 * H:2 * H]
        g_g = 2.0 * sig[:, 2 * H:3 * H] - 1.0
        o_g = sig[:, 3 * H:4 * H]
        return i_g, f_g, g_g, o_g

    # ---- timestep 0 peeled: h == c == 0, so no recurrent matmul and no f*c term ----
    i_g, _, g_g, o_g = activations(gates_x[0:1, :])
    c = i_g * g_g
    h = o_g * jnp.tanh(c)

    # ---- remaining 7 steps, fully unrolled (static slices; whole chain visible) ----
    for t in range(1, SEQ):
        g = gates_x[t:t + 1, :] + jnp.dot(h.astype(jnp.bfloat16), whh_t,
                                          preferred_element_type=jnp.float32)  # (1,256)
        i_g, f_g, g_g, o_g = activations(g)
        c = f_g * c + i_g * g_g
        h = o_g * jnp.tanh(c)

    # ---- MLP head on the final hidden state (f32; operands packed in head_ref) ----
    w1_t = head_ref[0:H, :]                                          # (64, 32)
    w2_t = head_ref[H:H + HEAD1, 0:OUT_DIM]                          # (32, 3)
    b2 = head_ref[H + HEAD1:H + HEAD1 + 1, 0:OUT_DIM]                # (1, 3)

    a = jnp.maximum(h, 0.0)                                          # relu1
    a = jnp.dot(a, w1_t, preferred_element_type=jnp.float32)         # lin1 (no bias)
    a = jnp.maximum(a, 0.0)                                          # relu2
    out = jnp.dot(a, w2_t, preferred_element_type=jnp.float32) + b2  # lin2 (+ bias)
    out_ref[...] = out.astype(out_ref.dtype)


def simple_lstm_forward(x, kernel_params):
    """x: (SEQ, 99) float32 -> (1, 3) float32 (== module's out.unsqueeze(0))."""
    wih_t, whhb, head = kernel_params
    vmem = pl.BlockSpec(memory_space=pltpu.MemorySpace.VMEM)
    cost = pl.CostEstimate(flops=800_000, bytes_accessed=120_000, transcendentals=4_800)
    return pl.pallas_call(
        simple_lstm_kernel,
        out_shape=jax.ShapeDtypeStruct((1, OUT_DIM), jnp.float32),
        in_specs=[vmem] * 4,
        out_specs=vmem,
        scratch_shapes=[pltpu.VMEM((SEQ, K_PAD), jnp.float32)],
        cost_estimate=cost,
    )(x, wih_t, whhb, head)


def make_raw_params(key):
    """Deterministic synthetic parameters with PyTorch LSTM/Linear shapes."""
    ks = jax.random.split(key, 6)
    scale = 1.0 / jnp.sqrt(HIDDEN)
    # nn.LSTM(99, 64, 1): weight_ih (256, 99), weight_hh (256, 64), biases (256,)
    w_ih = jax.random.uniform(ks[0], (4 * HIDDEN, INPUT_DIM), jnp.float32, -scale, scale)
    w_hh = jax.random.uniform(ks[1], (4 * HIDDEN, HIDDEN), jnp.float32, -scale, scale)
    b_ih = jax.random.uniform(ks[2], (4 * HIDDEN,), jnp.float32, -scale, scale)
    b_hh = jax.random.uniform(ks[3], (4 * HIDDEN,), jnp.float32, -scale, scale)
    # lin1: (32, 64) no bias; lin2: (3, 32) + bias (3,)  — init per _init_weight
    w1 = 0.01 * jax.random.normal(ks[4], (HEAD1, HIDDEN), jnp.float32)
    w2 = 0.01 * jax.random.normal(ks[5], (OUT_DIM, HEAD1), jnp.float32)
    b2 = jnp.zeros((OUT_DIM,), jnp.float32)
    return w_ih, w_hh, b_ih, b_hh, w1, w2, b2


def prep_params(raw):
    """PyTorch-layout params -> kernel layout (transpose, pad, g-gate x2, bf16, pack)."""
    w_ih, w_hh, b_ih, b_hh, w1, w2, b2 = raw
    H = HIDDEN
    # Pre-scale the g-gate slab by 2 so tanh(z) = 2*sigmoid(2z) - 1 inside the kernel.
    gscale = jnp.concatenate([jnp.ones((2 * H,), jnp.float32),
                              jnp.full((H,), 2.0, jnp.float32),
                              jnp.ones((H,), jnp.float32)])[None, :]            # (1,256)
    wih_t = jnp.pad(w_ih.T, ((0, K_PAD - INPUT_DIM), (0, 0))) * gscale          # (128,256)
    whh_t = w_hh.T * gscale                                                     # (64,256)
    bias = (b_ih + b_hh)[None, :] * gscale                                      # (1,256)
    whhb = jnp.concatenate([whh_t, bias], axis=0).astype(jnp.bfloat16)          # (65,256)
    head = jnp.concatenate(
        [w1.T,                                                   # (64, 32)
         jnp.pad(w2.T, ((0, 0), (0, HEAD1 - OUT_DIM))),          # (32, 32)
         jnp.pad(b2[None, :], ((0, 0), (0, HEAD1 - OUT_DIM)))],  # (1, 32)
        axis=0)                                                  # (97, 32) f32
    return wih_t.astype(jnp.bfloat16), whhb, head


def reference_forward(x, raw):
    """Pure-JAX f32 reference with PyTorch LSTM/Linear semantics (raw params)."""
    w_ih, w_hh, b_ih, b_hh, w1, w2, b2 = raw
    H = HIDDEN
    h = jnp.zeros((H,), jnp.float32)
    c = jnp.zeros((H,), jnp.float32)
    for t in range(SEQ):
        g = w_ih @ x[t] + w_hh @ h + b_ih + b_hh
        i = jax.nn.sigmoid(g[0:H])
        f = jax.nn.sigmoid(g[H:2 * H])
        gg = jnp.tanh(g[2 * H:3 * H])
        o = jax.nn.sigmoid(g[3 * H:4 * H])
        c = f * c + i * gg
        h = o * jnp.tanh(c)
    a = jnp.maximum(h, 0.0) @ w1.T
    out = jnp.maximum(a, 0.0) @ w2.T + b2
    return out[None, :]


if __name__ == "__main__":
    key = jax.random.PRNGKey(0)
    k_x, k_p = jax.random.split(key)
    # Module forward implies input (batch=1, seq, 99); we pass (seq, 99).
    x = jax.random.normal(k_x, (SEQ, INPUT_DIM), jnp.float32)
    raw = make_raw_params(k_p)
    params = prep_params(raw)

    out = simple_lstm_forward(x, params)
    out = jax.block_until_ready(out)

    ref = reference_forward(x, raw)
    assert out.shape == (1, OUT_DIM)
    # bf16 recurrent matmuls + approx-reciprocal sigmoid => loosened tolerance.
    assert jnp.allclose(out, ref, atol=5e-4, rtol=5e-2)
    print("KERNEL_OK")
</pallas_src>

<mosaic_0001>
module attributes {stable_mosaic.version = 11 : i64} {
  func.func @simple_lstm_kernel(%arg0: memref<8x99xf32, #tpu.memory_space<vmem>>, %arg1: memref<128x256xbf16, #tpu.memory_space<vmem>>, %arg2: memref<65x256xbf16, #tpu.memory_space<vmem>>, %arg3: memref<97x32xf32, #tpu.memory_space<vmem>>, %arg4: memref<1x3xf32, #tpu.memory_space<vmem>>, %arg5: memref<8x128xf32, #tpu.memory_space<vmem>>) attributes {dimension_semantics = [], scalar_prefetch = 0 : i64, scratch_operands = 1 : i64, tpu.core_type = #tpu.core_type<tc>} {
    %cst = arith.constant 0.000000e+00 : f32
    %0 = vector.broadcast %cst : f32 to vector<8x128xf32>
    %c0 = arith.constant 0 : index
    %c0_0 = arith.constant 0 : index
    %1 = vector.load %arg5[%c0, %c0_0] : memref<8x128xf32, #tpu.memory_space<vmem>>, vector<8x128xf32>
    tpu.vector_store %arg5[%c0, %c0_0], %0 {strides = array<i32>} : memref<8x128xf32, #tpu.memory_space<vmem>>, vector<8x128xf32>,
    %c0_1 = arith.constant 0 : index
    %c0_2 = arith.constant 0 : index
    %2 = vector.load %arg0[%c0_1, %c0_2] : memref<8x99xf32, #tpu.memory_space<vmem>>, vector<8x99xf32>
    %c0_3 = arith.constant 0 : index
    %c0_4 = arith.constant 0 : index
    %3 = vector.load %arg5[%c0_3, %c0_4] : memref<8x128xf32, #tpu.memory_space<vmem>>, vector<8x99xf32>
    tpu.vector_store %arg5[%c0_3, %c0_4], %2 {strides = array<i32>} : memref<8x128xf32, #tpu.memory_space<vmem>>, vector<8x99xf32>,
    %c0_5 = arith.constant 0 : index
    %c0_6 = arith.constant 0 : index
    %4 = vector.load %arg5[%c0_5, %c0_6] : memref<8x128xf32, #tpu.memory_space<vmem>>, vector<8x128xf32>
    %5 = arith.truncf %4 : vector<8x128xf32> to vector<8x128xbf16>
    %c0_7 = arith.constant 0 : index
    %c0_8 = arith.constant 0 : index
    %6 = vector.load %arg1[%c0_7, %c0_8] : memref<128x256xbf16, #tpu.memory_space<vmem>>, vector<128x256xbf16>
    %c0_9 = arith.constant 0 : index
    %c0_10 = arith.constant 0 : index
    %7 = vector.load %arg2[%c0_9, %c0_10] : memref<65x256xbf16, #tpu.memory_space<vmem>>, vector<64x256xbf16>
    %c64 = arith.constant 64 : index
    %c0_11 = arith.constant 0 : index
    %8 = vector.load %arg2[%c64, %c0_11] : memref<65x256xbf16, #tpu.memory_space<vmem>>, vector<1x256xbf16>
    %9 = arith.extf %8 : vector<1x256xbf16> to vector<1x256xf32>
    %cst_12 = arith.constant dense<0.000000e+00> : vector<8x256xf32>
    %10 = tpu.matmul %5, %6, %cst_12 {dimension_numbers = #tpu.dot_dimension_numbers<[1], [0], [0], [1], [0, 0, 1, 1], [], []>} : vector<8x128xbf16>, vector<128x256xbf16>, vector<8x256xf32> -> vector<8x256xf32>
    %11 = vector.broadcast %9 : vector<1x256xf32> to vector<8x256xf32>
    %12 = arith.addf %10, %11 : vector<8x256xf32>
    %13 = vector.extract_strided_slice %12 {offsets = [0, 0], sizes = [1, 256], strides = [1, 1]} : vector<8x256xf32> to vector<1x256xf32>
    %cst_13 = arith.constant 0.000000e+00 : f32
    %14 = vector.broadcast %cst_13 : f32 to vector<1x256xf32>
    %15 = arith.subf %14, %13 : vector<1x256xf32>
    %16 = math.exp %15 : vector<1x256xf32>
    %cst_14 = arith.constant 1.000000e+00 : f32
    %17 = vector.broadcast %cst_14 : f32 to vector<1x256xf32>
    %18 = arith.addf %17, %16 : vector<1x256xf32>
    %19 = tpu.reciprocal %18 {approx = true} : vector<1x256xf32> -> vector<1x256xf32>
    %20 = vector.extract_strided_slice %19 {offsets = [0, 0], sizes = [1, 64], strides = [1, 1]} : vector<1x256xf32> to vector<1x64xf32>
    %21 = vector.extract_strided_slice %19 {offsets = [0, 128], sizes = [1, 64], strides = [1, 1]} : vector<1x256xf32> to vector<1x64xf32>
    %cst_15 = arith.constant 2.000000e+00 : f32
    %22 = vector.broadcast %cst_15 : f32 to vector<1x64xf32>
    %23 = arith.mulf %22, %21 : vector<1x64xf32>
    %cst_16 = arith.constant 1.000000e+00 : f32
    %24 = vector.broadcast %cst_16 : f32 to vector<1x64xf32>
    %25 = arith.subf %23, %24 : vector<1x64xf32>
    %26 = vector.extract_strided_slice %19 {offsets = [0, 192], sizes = [1, 64], strides = [1, 1]} : vector<1x256xf32> to vector<1x64xf32>
    %27 = arith.mulf %20, %25 : vector<1x64xf32>
    %28 = math.tanh %27 : vector<1x64xf32>
    %29 = arith.mulf %26, %28 : vector<1x64xf32>
    %30 = vector.extract_strided_slice %12 {offsets = [1, 0], sizes = [1, 256], strides = [1, 1]} : vector<8x256xf32> to vector<1x256xf32>
    %31 = arith.truncf %29 : vector<1x64xf32> to vector<1x64xbf16>
    %cst_17 = arith.constant dense<0.000000e+00> : vector<1x256xf32>
    %32 = tpu.matmul %31, %7, %cst_17 {dimension_numbers = #tpu.dot_dimension_numbers<[1], [0], [0], [1], [0, 0, 1, 1], [], []>} : vector<1x64xbf16>, vector<64x256xbf16>, vector<1x256xf32> -> vector<1x256xf32>
    %33 = arith.addf %30, %32 : vector<1x256xf32>
    %cst_18 = arith.constant 0.000000e+00 : f32
    %34 = vector.broadcast %cst_18 : f32 to vector<1x256xf32>
    %35 = arith.subf %34, %33 : vector<1x256xf32>
    %36 = math.exp %35 : vector<1x256xf32>
    %cst_19 = arith.constant 1.000000e+00 : f32
    %37 = vector.broadcast %cst_19 : f32 to vector<1x256xf32>
    %38 = arith.addf %37, %36 : vector<1x256xf32>
    %39 = tpu.reciprocal %38 {approx = true} : vector<1x256xf32> -> vector<1x256xf32>
    %40 = vector.extract_strided_slice %39 {offsets = [0, 0], sizes = [1, 64], strides = [1, 1]} : vector<1x256xf32> to vector<1x64xf32>
    %41 = vector.extract_strided_slice %39 {offsets = [0, 64], sizes = [1, 64], strides = [1, 1]} : vector<1x256xf32> to vector<1x64xf32>
    %42 = vector.extract_strided_slice %39 {offsets = [0, 128], sizes = [1, 64], strides = [1, 1]} : vector<1x256xf32> to vector<1x64xf32>
    %cst_20 = arith.constant 2.000000e+00 : f32
    %43 = vector.broadcast %cst_20 : f32 to vector<1x64xf32>
    %44 = arith.mulf %43, %42 : vector<1x64xf32>
    %cst_21 = arith.constant 1.000000e+00 : f32
    %45 = vector.broadcast %cst_21 : f32 to vector<1x64xf32>
    %46 = arith.subf %44, %45 : vector<1x64xf32>
    %47 = vector.extract_strided_slice %39 {offsets = [0, 192], sizes = [1, 64], strides = [1, 1]} : vector<1x256xf32> to vector<1x64xf32>
    %48 = arith.mulf %41, %27 : vector<1x64xf32>
    %49 = arith.mulf %40, %46 : vector<1x64xf32>
    %50 = arith.addf %48, %49 : vector<1x64xf32>
    %51 = math.tanh %50 : vector<1x64xf32>
    %52 = arith.mulf %47, %51 : vector<1x64xf32>
    %53 = vector.extract_strided_slice %12 {offsets = [2, 0], sizes = [1, 256], strides = [1, 1]} : vector<8x256xf32> to vector<1x256xf32>
    %54 = arith.truncf %52 : vector<1x64xf32> to vector<1x64xbf16>
    %cst_22 = arith.constant dense<0.000000e+00> : vector<1x256xf32>
    %55 = tpu.matmul %54, %7, %cst_22 {dimension_numbers = #tpu.dot_dimension_numbers<[1], [0], [0], [1], [0, 0, 1, 1], [], []>} : vector<1x64xbf16>, vector<64x256xbf16>, vector<1x256xf32> -> vector<1x256xf32>
    %56 = arith.addf %53, %55 : vector<1x256xf32>
    %cst_23 = arith.constant 0.000000e+00 : f32
    %57 = vector.broadcast %cst_23 : f32 to vector<1x256xf32>
    %58 = arith.subf %57, %56 : vector<1x256xf32>
    %59 = math.exp %58 : vector<1x256xf32>
    %cst_24 = arith.constant 1.000000e+00 : f32
    %60 = vector.broadcast %cst_24 : f32 to vector<1x256xf32>
    %61 = arith.addf %60, %59 : vector<1x256xf32>
    %62 = tpu.reciprocal %61 {approx = true} : vector<1x256xf32> -> vector<1x256xf32>
    %63 = vector.extract_strided_slice %62 {offsets = [0, 0], sizes = [1, 64], strides = [1, 1]} : vector<1x256xf32> to vector<1x64xf32>
    %64 = vector.extract_strided_slice %62 {offsets = [0, 64], sizes = [1, 64], strides = [1, 1]} : vector<1x256xf32> to vector<1x64xf32>
    %65 = vector.extract_strided_slice %62 {offsets = [0, 128], sizes = [1, 64], strides = [1, 1]} : vector<1x256xf32> to vector<1x64xf32>
    %cst_25 = arith.constant 2.000000e+00 : f32
    %66 = vector.broadcast %cst_25 : f32 to vector<1x64xf32>
    %67 = arith.mulf %66, %65 : vector<1x64xf32>
    %cst_26 = arith.constant 1.000000e+00 : f32
    %68 = vector.broadcast %cst_26 : f32 to vector<1x64xf32>
    %69 = arith.subf %67, %68 : vector<1x64xf32>
    %70 = vector.extract_strided_slice %62 {offsets = [0, 192], sizes = [1, 64], strides = [1, 1]} : vector<1x256xf32> to vector<1x64xf32>
    %71 = arith.mulf %64, %50 : vector<1x64xf32>
    %72 = arith.mulf %63, %69 : vector<1x64xf32>
    %73 = arith.addf %71, %72 : vector<1x64xf32>
    %74 = math.tanh %73 : vector<1x64xf32>
    %75 = arith.mulf %70, %74 : vector<1x64xf32>
    %76 = vector.extract_strided_slice %12 {offsets = [3, 0], sizes = [1, 256], strides = [1, 1]} : vector<8x256xf32> to vector<1x256xf32>
    %77 = arith.truncf %75 : vector<1x64xf32> to vector<1x64xbf16>
    %cst_27 = arith.constant dense<0.000000e+00> : vector<1x256xf32>
    %78 = tpu.matmul %77, %7, %cst_27 {dimension_numbers = #tpu.dot_dimension_numbers<[1], [0], [0], [1], [0, 0, 1, 1], [], []>} : vector<1x64xbf16>, vector<64x256xbf16>, vector<1x256xf32> -> vector<1x256xf32>
    %79 = arith.addf %76, %78 : vector<1x256xf32>
    %cst_28 = arith.constant 0.000000e+00 : f32
    %80 = vector.broadcast %cst_28 : f32 to vector<1x256xf32>
    %81 = arith.subf %80, %79 : vector<1x256xf32>
    %82 = math.exp %81 : vector<1x256xf32>
    %cst_29 = arith.constant 1.000000e+00 : f32
    %83 = vector.broadcast %cst_29 : f32 to vector<1x256xf32>
    %84 = arith.addf %83, %82 : vector<1x256xf32>
    %85 = tpu.reciprocal %84 {approx = true} : vector<1x256xf32> -> vector<1x256xf32>
    %86 = vector.extract_strided_slice %85 {offsets = [0, 0], sizes = [1, 64], strides = [1, 1]} : vector<1x256xf32> to vector<1x64xf32>
    %87 = vector.extract_strided_slice %85 {offsets = [0, 64], sizes = [1, 64], strides = [1, 1]} : vector<1x256xf32> to vector<1x64xf32>
    %88 = vector.extract_strided_slice %85 {offsets = [0, 128], sizes = [1, 64], strides = [1, 1]} : vector<1x256xf32> to vector<1x64xf32>
    %cst_30 = arith.constant 2.000000e+00 : f32
    %89 = vector.broadcast %cst_30 : f32 to vector<1x64xf32>
    %90 = arith.mulf %89, %88 : vector<1x64xf32>
    %cst_31 = arith.constant 1.000000e+00 : f32
    %91 = vector.broadcast %cst_31 : f32 to vector<1x64xf32>
    %92 = arith.subf %90, %91 : vector<1x64xf32>
    %93 = vector.extract_strided_slice %85 {offsets = [0, 192], sizes = [1, 64], strides = [1, 1]} : vector<1x256xf32> to vector<1x64xf32>
    %94 = arith.mulf %87, %73 : vector<1x64xf32>
    %95 = arith.mulf %86, %92 : vector<1x64xf32>
    %96 = arith.addf %94, %95 : vector<1x64xf32>
    %97 = math.tanh %96 : vector<1x64xf32>
    %98 = arith.mulf %93, %97 : vector<1x64xf32>
    %99 = vector.extract_strided_slice %12 {offsets = [4, 0], sizes = [1, 256], strides = [1, 1]} : vector<8x256xf32> to vector<1x256xf32>
    %100 = arith.truncf %98 : vector<1x64xf32> to vector<1x64xbf16>
    %cst_32 = arith.constant dense<0.000000e+00> : vector<1x256xf32>
    %101 = tpu.matmul %100, %7, %cst_32 {dimension_numbers = #tpu.dot_dimension_numbers<[1], [0], [0], [1], [0, 0, 1, 1], [], []>} : vector<1x64xbf16>, vector<64x256xbf16>, vector<1x256xf32> -> vector<1x256xf32>
    %102 = arith.addf %99, %101 : vector<1x256xf32>
    %cst_33 = arith.constant 0.000000e+00 : f32
    %103 = vector.broadcast %cst_33 : f32 to vector<1x256xf32>
    %104 = arith.subf %103, %102 : vector<1x256xf32>
    %105 = math.exp %104 : vector<1x256xf32>
    %cst_34 = arith.constant 1.000000e+00 : f32
    %106 = vector.broadcast %cst_34 : f32 to vector<1x256xf32>
    %107 = arith.addf %106, %105 : vector<1x256xf32>
    %108 = tpu.reciprocal %107 {approx = true} : vector<1x256xf32> -> vector<1x256xf32>
    %109 = vector.extract_strided_slice %108 {offsets = [0, 0], sizes = [1, 64], strides = [1, 1]} : vector<1x256xf32> to vector<1x64xf32>
    %110 = vector.extract_strided_slice %108 {offsets = [0, 64], sizes = [1, 64], strides = [1, 1]} : vector<1x256xf32> to vector<1x64xf32>
    %111 = vector.extract_strided_slice %108 {offsets = [0, 128], sizes = [1, 64], strides = [1, 1]} : vector<1x256xf32> to vector<1x64xf32>
    %cst_35 = arith.constant 2.000000e+00 : f32
    %112 = vector.broadcast %cst_35 : f32 to vector<1x64xf32>
    %113 = arith.mulf %112, %111 : vector<1x64xf32>
    %cst_36 = arith.constant 1.000000e+00 : f32
    %114 = vector.broadcast %cst_36 : f32 to vector<1x64xf32>
    %115 = arith.subf %113, %114 : vector<1x64xf32>
    %116 = vector.extract_strided_slice %108 {offsets = [0, 192], sizes = [1, 64], strides = [1, 1]} : vector<1x256xf32> to vector<1x64xf32>
    %117 = arith.mulf %110, %96 : vector<1x64xf32>
    %118 = arith.mulf %109, %115 : vector<1x64xf32>
    %119 = arith.addf %117, %118 : vector<1x64xf32>
    %120 = math.tanh %119 : vector<1x64xf32>
    %121 = arith.mulf %116, %120 : vector<1x64xf32>
    %122 = vector.extract_strided_slice %12 {offsets = [5, 0], sizes = [1, 256], strides = [1, 1]} : vector<8x256xf32> to vector<1x256xf32>
    %123 = arith.truncf %121 : vector<1x64xf32> to vector<1x64xbf16>
    %cst_37 = arith.constant dense<0.000000e+00> : vector<1x256xf32>
    %124 = tpu.matmul %123, %7, %cst_37 {dimension_numbers = #tpu.dot_dimension_numbers<[1], [0], [0], [1], [0, 0, 1, 1], [], []>} : vector<1x64xbf16>, vector<64x256xbf16>, vector<1x256xf32> -> vector<1x256xf32>
    %125 = arith.addf %122, %124 : vector<1x256xf32>
    %cst_38 = arith.constant 0.000000e+00 : f32
    %126 = vector.broadcast %cst_38 : f32 to vector<1x256xf32>
    %127 = arith.subf %126, %125 : vector<1x256xf32>
    %128 = math.exp %127 : vector<1x256xf32>
    %cst_39 = arith.constant 1.000000e+00 : f32
    %129 = vector.broadcast %cst_39 : f32 to vector<1x256xf32>
    %130 = arith.addf %129, %128 : vector<1x256xf32>
    %131 = tpu.reciprocal %130 {approx = true} : vector<1x256xf32> -> vector<1x256xf32>
    %132 = vector.extract_strided_slice %131 {offsets = [0, 0], sizes = [1, 64], strides = [1, 1]} : vector<1x256xf32> to vector<1x64xf32>
    %133 = vector.extract_strided_slice %131 {offsets = [0, 64], sizes = [1, 64], strides = [1, 1]} : vector<1x256xf32> to vector<1x64xf32>
    %134 = vector.extract_strided_slice %131 {offsets = [0, 128], sizes = [1, 64], strides = [1, 1]} : vector<1x256xf32> to vector<1x64xf32>
    %cst_40 = arith.constant 2.000000e+00 : f32
    %135 = vector.broadcast %cst_40 : f32 to vector<1x64xf32>
    %136 = arith.mulf %135, %134 : vector<1x64xf32>
    %cst_41 = arith.constant 1.000000e+00 : f32
    %137 = vector.broadcast %cst_41 : f32 to vector<1x64xf32>
    %138 = arith.subf %136, %137 : vector<1x64xf32>
    %139 = vector.extract_strided_slice %131 {offsets = [0, 192], sizes = [1, 64], strides = [1, 1]} : vector<1x256xf32> to vector<1x64xf32>
    %140 = arith.mulf %133, %119 : vector<1x64xf32>
    %141 = arith.mulf %132, %138 : vector<1x64xf32>
    %142 = arith.addf %140, %141 : vector<1x64xf32>
    %143 = math.tanh %142 : vector<1x64xf32>
    %144 = arith.mulf %139, %143 : vector<1x64xf32>
    %145 = vector.extract_strided_slice %12 {offsets = [6, 0], sizes = [1, 256], strides = [1, 1]} : vector<8x256xf32> to vector<1x256xf32>
    %146 = arith.truncf %144 : vector<1x64xf32> to vector<1x64xbf16>
    %cst_42 = arith.constant dense<0.000000e+00> : vector<1x256xf32>
    %147 = tpu.matmul %146, %7, %cst_42 {dimension_numbers = #tpu.dot_dimension_numbers<[1], [0], [0], [1], [0, 0, 1, 1], [], []>} : vector<1x64xbf16>, vector<64x256xbf16>, vector<1x256xf32> -> vector<1x256xf32>
    %148 = arith.addf %145, %147 : vector<1x256xf32>
    %cst_43 = arith.constant 0.000000e+00 : f32
    %149 = vector.broadcast %cst_43 : f32 to vector<1x256xf32>
    %150 = arith.subf %149, %148 : vector<1x256xf32>
    %151 = math.exp %150 : vector<1x256xf32>
    %cst_44 = arith.constant 1.000000e+00 : f32
    %152 = vector.broadcast %cst_44 : f32 to vector<1x256xf32>
    %153 = arith.addf %152, %151 : vector<1x256xf32>
    %154 = tpu.reciprocal %153 {approx = true} : vector<1x256xf32> -> vector<1x256xf32>
    %155 = vector.extract_strided_slice %154 {offsets = [0, 0], sizes = [1, 64], strides = [1, 1]} : vector<1x256xf32> to vector<1x64xf32>
    %156 = vector.extract_strided_slice %154 {offsets = [0, 64], sizes = [1, 64], strides = [1, 1]} : vector<1x256xf32> to vector<1x64xf32>
    %157 = vector.extract_strided_slice %154 {offsets = [0, 128], sizes = [1, 64], strides = [1, 1]} : vector<1x256xf32> to vector<1x64xf32>
    %cst_45 = arith.constant 2.000000e+00 : f32
    %158 = vector.broadcast %cst_45 : f32 to vector<1x64xf32>
    %159 = arith.mulf %158, %157 : vector<1x64xf32>
    %cst_46 = arith.constant 1.000000e+00 : f32
    %160 = vector.broadcast %cst_46 : f32 to vector<1x64xf32>
    %161 = arith.subf %159, %160 : vector<1x64xf32>
    %162 = vector.extract_strided_slice %154 {offsets = [0, 192], sizes = [1, 64], strides = [1, 1]} : vector<1x256xf32> to vector<1x64xf32>
    %163 = arith.mulf %156, %142 : vector<1x64xf32>
    %164 = arith.mulf %155, %161 : vector<1x64xf32>
    %165 = arith.addf %163, %164 : vector<1x64xf32>
    %166 = math.tanh %165 : vector<1x64xf32>
    %167 = arith.mulf %162, %166 : vector<1x64xf32>
    %168 = vector.extract_strided_slice %12 {offsets = [7, 0], sizes = [1, 256], strides = [1, 1]} : vector<8x256xf32> to vector<1x256xf32>
    %169 = arith.truncf %167 : vector<1x64xf32> to vector<1x64xbf16>
    %cst_47 = arith.constant dense<0.000000e+00> : vector<1x256xf32>
    %170 = tpu.matmul %169, %7, %cst_47 {dimension_numbers = #tpu.dot_dimension_numbers<[1], [0], [0], [1], [0, 0, 1, 1], [], []>} : vector<1x64xbf16>, vector<64x256xbf16>, vector<1x256xf32> -> vector<1x256xf32>
    %171 = arith.addf %168, %170 : vector<1x256xf32>
    %cst_48 = arith.constant 0.000000e+00 : f32
    %172 = vector.broadcast %cst_48 : f32 to vector<1x256xf32>
    %173 = arith.subf %172, %171 : vector<1x256xf32>
    %174 = math.exp %173 : vector<1x256xf32>
    %cst_49 = arith.constant 1.000000e+00 : f32
    %175 = vector.broadcast %cst_49 : f32 to vector<1x256xf32>
    %176 = arith.addf %175, %174 : vector<1x256xf32>
    %177 = tpu.reciprocal %176 {approx = true} : vector<1x256xf32> -> vector<1x256xf32>
    %178 = vector.extract_strided_slice %177 {offsets = [0, 0], sizes = [1, 64], strides = [1, 1]} : vector<1x256xf32> to vector<1x64xf32>
    %179 = vector.extract_strided_slice %177 {offsets = [0, 64], sizes = [1, 64], strides = [1, 1]} : vector<1x256xf32> to vector<1x64xf32>
    %180 = vector.extract_strided_slice %177 {offsets = [0, 128], sizes = [1, 64], strides = [1, 1]} : vector<1x256xf32> to vector<1x64xf32>
    %cst_50 = arith.constant 2.000000e+00 : f32
    %181 = vector.broadcast %cst_50 : f32 to vector<1x64xf32>
    %182 = arith.mulf %181, %180 : vector<1x64xf32>
    %cst_51 = arith.constant 1.000000e+00 : f32
    %183 = vector.broadcast %cst_51 : f32 to vector<1x64xf32>
    %184 = arith.subf %182, %183 : vector<1x64xf32>
    %185 = vector.extract_strided_slice %177 {offsets = [0, 192], sizes = [1, 64], strides = [1, 1]} : vector<1x256xf32> to vector<1x64xf32>
    %186 = arith.mulf %179, %165 : vector<1x64xf32>
    %187 = arith.mulf %178, %184 : vector<1x64xf32>
    %188 = arith.addf %186, %187 : vector<1x64xf32>
    %189 = math.tanh %188 : vector<1x64xf32>
    %190 = arith.mulf %185, %189 : vector<1x64xf32>
    %c0_52 = arith.constant 0 : index
    %c0_53 = arith.constant 0 : index
    %191 = vector.load %arg3[%c0_52, %c0_53] : memref<97x32xf32, #tpu.memory_space<vmem>>, vector<64x32xf32>
    %c64_54 = arith.constant 64 : index
    %c0_55 = arith.constant 0 : index
    %192 = vector.load %arg3[%c64_54, %c0_55] : memref<97x32xf32, #tpu.memory_space<vmem>>, vector<32x3xf32>
    %c96 = arith.constant 96 : index
    %c0_56 = arith.constant 0 : index
    %193 = vector.load %arg3[%c96, %c0_56] : memref<97x32xf32, #tpu.memory_space<vmem>>, vector<1x3xf32>
    %cst_57 = arith.constant 0.000000e+00 : f32
    %194 = vector.broadcast %cst_57 : f32 to vector<1x64xf32>
    %195 = arith.maximumf %190, %194 : vector<1x64xf32>
    %cst_58 = arith.constant dense<0.000000e+00> : vector<1x32xf32>
    %196 = tpu.matmul %195, %191, %cst_58 {dimension_numbers = #tpu.dot_dimension_numbers<[1], [0], [0], [1], [0, 0, 1, 1], [], []>} : vector<1x64xf32>, vector<64x32xf32>, vector<1x32xf32> -> vector<1x32xf32>
    %cst_59 = arith.constant 0.000000e+00 : f32
    %197 = vector.broadcast %cst_59 : f32 to vector<1x32xf32>
    %198 = arith.maximumf %196, %197 : vector<1x32xf32>
    %cst_60 = arith.constant dense<0.000000e+00> : vector<1x3xf32>
    %199 = tpu.matmul %198, %192, %cst_60 {dimension_numbers = #tpu.dot_dimension_numbers<[1], [0], [0], [1], [0, 0, 1, 1], [], []>} : vector<1x32xf32>, vector<32x3xf32>, vector<1x3xf32> -> vector<1x3xf32>
    %200 = arith.addf %199, %193 : vector<1x3xf32>
    %c0_61 = arith.constant 0 : index
    %c0_62 = arith.constant 0 : index
    %201 = vector.load %arg4[%c0_61, %c0_62] : memref<1x3xf32, #tpu.memory_space<vmem>>, vector<1x3xf32>
    tpu.vector_store %arg4[%c0_61, %c0_62], %200 {strides = array<i32>} : memref<1x3xf32, #tpu.memory_space<vmem>>, vector<1x3xf32>,
    return
  }
}

</mosaic_0001>

<llo_original>
// kernel: tpu_custom_call.1
$region0: #{tpu_custom_call.1}
  #allocation0 [shape = 'u32[]', space=smem, size = 0x4, offset = 0x4, fixed_abs, tag = 'smem constant byte address 0x4 - core index']
  #allocation1 [shape = 'u32[72,128]{1,0:T(1,128)}', space=vmem, size = 0x9000, scoped, tag = 'internal scratch']
  #allocation2 [shape = 'f32[8,128]{1,0:T(8,128)}', space=vmem, size = 0x1000, scoped, tag = 'scratch operand']
  %s0 = inlined_call_operand.vmem [shape: f32[8,99], index: 0, kind: input, shape index: {}]
  %s1 = inlined_call_operand.vmem [shape: bf16[128,256], index: 1, kind: input, shape index: {}]
  %s2 = inlined_call_operand.hbm [shape: bf16[65,256], index: 2, kind: input, shape index: {}]
  %s3 = inlined_call_operand.vmem [shape: f32[97,32], index: 3, kind: input, shape index: {}]
  %s4 = inlined_call_operand.hbm [shape: f32[1,3], index: 4, kind: output, shape index: {}]
  %s5 = sld [smem:[#allocation0]]
  $region30: #{tpu_custom_call.1} parent=0
    _
  %s7 = ssub.s32 1, %s5
  %s8 = scalar_select 0, %s7, %s5
  $region1: #{tpu_custom_call.1} parent=0
    #allocation3 [shape = 'u8[36864]{0}', space=vmem, size = 0x9000, scoped, tag = 'input window, operand 2, single buffered']
    #allocation4 [shape = 's32[1]{0}', space=sflag, size = 0x4, scoped, tag = 'scoped memory for tpu_custom_call.1']
    #allocation5 [shape = 's32[1]{0}', space=sflag, size = 0x4, scoped, tag = 'scoped memory for tpu_custom_call.1']
    #allocation6 [shape = 'u8[512]{0}', space=vmem, size = 0x400, scoped, tag = 'output window, operand 0, single buffered']
    %9 = vsyncpa [#allocation4], 0
    %10 = vsyncpa [#allocation5], 0
    // Predicated region
    $region2: #{tpu_custom_call.1} parent=1 // pred_check
      _
    $region3: #{tpu_custom_call.1} parent=1 // pred_check_branch
      %12 = sbr.rel (0) target = $region5
    $region4: #{tpu_custom_call.1} parent=1 // pred_region
      _
    $region5: #{tpu_custom_call.1} parent=1 // pred_fallthru
      _
    // Predicated region
    $region6: #{tpu_custom_call.1} parent=1 // pred_check
      _
    $region7: #{tpu_custom_call.1} parent=1 // pred_check_branch
      %14 = sbr.rel (0) target = $region9
    $region8: #{tpu_custom_call.1} parent=1 // pred_region
      _
    $region9: #{tpu_custom_call.1} parent=1 // pred_fallthru
      _
    // Predicated region
    $region10: #{tpu_custom_call.1} parent=1 // pred_check
      _
    $region11: #{tpu_custom_call.1} parent=1 // pred_check_branch
      %16 = sbr.rel (0) target = $region13
    $region12: #{tpu_custom_call.1} parent=1 // pred_region
      %18 = vsyncadd [#allocation4], 0
      %s19 = sshll.u32 %s2, 4
      %s20 = int_to_ptr.hbm [resolvable:$true] %s19
      %s21 = sshll.u32 [#allocation3], 4
      %s22 = int_to_ptr.vmem [resolvable:$true] %s21
      %27 = dma.hbm_to_vmem [thread:$0]  %s20, 1152, %s22, [#allocation4], 128, 128, 8
    $region13: #{tpu_custom_call.1} parent=1 // pred_fallthru
      _
    // Predicated region
    $region14: #{tpu_custom_call.1} parent=1 // pred_check
      _
    $region15: #{tpu_custom_call.1} parent=1 // pred_check_branch
      %29 = sbr.rel (0) target = $region17
    $region16: #{tpu_custom_call.1} parent=1 // pred_region
      _
    $region17: #{tpu_custom_call.1} parent=1 // pred_fallthru
      _
    // Predicated region
    $region18: #{tpu_custom_call.1} parent=1 // pred_check
      _
    $region19: #{tpu_custom_call.1} parent=1 // pred_check_branch
      %31 = sbr.rel (0) target = $region21
    $region20: #{tpu_custom_call.1} parent=1 // pred_region
      %33 = dma.done [#allocation4], 1152
    $region21: #{tpu_custom_call.1} parent=1 // pred_fallthru
      _
    %35 = vst [vmem:[#allocation2] sm:$0xff] 0.0
    %v36 = vld [vmem:[%s0] sm:$0xff]
    %vm37 = vcmask 809984
    %38 = vst.msk [vmem:[#allocation2] sm:$0xff] %vm37, %v36
    %v39 = vld [vmem:[#allocation2] sm:$0xff]
    %v40 = vpack.c.bf16 %v39, %v39
    %v41 = vld [vmem:[%s1] sm:$0xff]
    %v42 = vld [vmem:[%s1 + $0x8] sm:$0xff]
    %v43 = vld [vmem:[%s1 + $0x10] sm:$0xff]
    %v44 = vld [vmem:[%s1 + $0x18] sm:$0xff]
    %v45 = vld [vmem:[%s1 + $0x20] sm:$0xff]
    %v46 = vld [vmem:[%s1 + $0x28] sm:$0xff]
    %v47 = vld [vmem:[%s1 + $0x30] sm:$0xff]
    %v48 = vld [vmem:[%s1 + $0x38] sm:$0xff]
    %v49 = vld [vmem:[%s1 + $0x40] sm:$0xff]
    %v50 = vld [vmem:[%s1 + $0x48] sm:$0xff]
    %v51 = vld [vmem:[%s1 + $0x50] sm:$0xff]
    %v52 = vld [vmem:[%s1 + $0x58] sm:$0xff]
    %v53 = vld [vmem:[%s1 + $0x60] sm:$0xff]
    %v54 = vld [vmem:[%s1 + $0x68] sm:$0xff]
    %v55 = vld [vmem:[%s1 + $0x70] sm:$0xff]
    %v56 = vld [vmem:[%s1 + $0x78] sm:$0xff]
    %v57 = vld [vmem:[#allocation3] sm:$0xff]
    %v58 = vld [vmem:[#allocation3 + $0x8] sm:$0xff]
    %v59 = vld [vmem:[#allocation3 + $0x10] sm:$0xff]
    %v60 = vld [vmem:[#allocation3 + $0x18] sm:$0xff]
    %v61 = vld [vmem:[#allocation3 + $0x20] sm:$0xff]
    %v62 = vld [vmem:[#allocation3 + $0x28] sm:$0xff]
    %v63 = vld [vmem:[#allocation3 + $0x30] sm:$0xff]
    %v64 = vld [vmem:[#allocation3 + $0x38] sm:$0xff]
    %v65 = vld [vmem:[#allocation3 + $0x40] sm:$0x11]
    %v66 = vunpack.c.l.bf16 %v65
    %v67 = vunpack.c.h.bf16 %v65
    %v68 = vperm.slane %v66, 0
    %v69 = vperm.slane %v67, 0
    %v86 = vunpack.c.l.b16 %v41
    %v87 = vunpack.c.h.b16 %v41
    %v88 = vunpack.c.l.b16 %v42
    %v89 = vunpack.c.h.b16 %v42
    %v90 = vunpack.c.l.b16 %v43
    %v91 = vunpack.c.h.b16 %v43
    %v92 = vunpack.c.l.b16 %v44
    %v93 = vunpack.c.h.b16 %v44
    %v94 = vunpack.c.l.b16 %v45
    %v95 = vunpack.c.h.b16 %v45
    %v96 = vunpack.c.l.b16 %v46
    %v97 = vunpack.c.h.b16 %v46
    %v98 = vunpack.c.l.b16 %v47
    %v99 = vunpack.c.h.b16 %v47
    %v100 = vunpack.c.l.b16 %v48
    %v101 = vunpack.c.h.b16 %v48
    %v102 = vunpack.c.l.b16 %v49
    %v103 = vunpack.c.h.b16 %v49
    %v104 = vunpack.c.l.b16 %v50
    %v105 = vunpack.c.h.b16 %v50
    %v106 = vunpack.c.l.b16 %v51
    %v107 = vunpack.c.h.b16 %v51
    %v108 = vunpack.c.l.b16 %v52
    %v109 = vunpack.c.h.b16 %v52
    %v110 = vunpack.c.l.b16 %v53
    %v111 = vunpack.c.h.b16 %v53
    %v112 = vunpack.c.l.b16 %v54
    %v113 = vunpack.c.h.b16 %v54
    %v114 = vunpack.c.l.b16 %v55
    %v115 = vunpack.c.h.b16 %v55
    %v116 = vunpack.c.l.b16 %v56
    %v117 = vunpack.c.h.b16 %v56
    %v118 = vpack.c.b16 %v88, %v86
    %v119 = vpack.c.b16 %v89, %v87
    %v120 = vpack.c.b16 %v92, %v90
    %v121 = vpack.c.b16 %v93, %v91
    %v122 = vpack.c.b16 %v96, %v94
    %v123 = vpack.c.b16 %v97, %v95
    %v124 = vpack.c.b16 %v100, %v98
    %v125 = vpack.c.b16 %v101, %v99
    %v126 = vpack.c.b16 %v104, %v102
    %v127 = vpack.c.b16 %v105, %v103
    %v128 = vpack.c.b16 %v108, %v106
    %v129 = vpack.c.b16 %v109, %v107
    %v130 = vpack.c.b16 %v112, %v110
    %v131 = vpack.c.b16 %v113, %v111
    %v132 = vpack.c.b16 %v116, %v114
    %v133 = vpack.c.b16 %v117, %v115
    %150 = vmatpush.bf16.msra.mxu0 %v132
    %151 = vmatpush.bf16.msra.mxu0 %v130
    %152 = vmatpush.bf16.msra.mxu0 %v128
    %153 = vmatpush.bf16.msra.mxu0 %v126
    %154 = vmatpush.bf16.msra.mxu0 %v124
    %155 = vmatpush.bf16.msra.mxu0 %v122
    %156 = vmatpush.bf16.msra.mxu0 %v120
    %157 = vmatpush.bf16.msra.mxu0 %v118
    %158 = vmatmul.bf16.gmra.mxu0 %v40
    %v159 = vpop.f32.mrf.mxu0
    %v160 = vadd.f32 %v68, %v159
    %v161 = vpop.f32.mrf.mxu0
    %162 = vdwg.mxu0
    %163 = vmatpush.bf16.msra.mxu0 %v133
    %164 = vmatpush.bf16.msra.mxu0 %v131
    %165 = vmatpush.bf16.msra.mxu0 %v129
    %166 = vmatpush.bf16.msra.mxu0 %v127
    %167 = vmatpush.bf16.msra.mxu0 %v125
    %168 = vmatpush.bf16.msra.mxu0 %v123
    %169 = vmatpush.bf16.msra.mxu0 %v121
    %170 = vmatpush.bf16.msra.mxu0 %v119
    %171 = vmatmul.bf16.gmra.mxu0 %v40
    %v172 = vpop.f32.mrf.mxu0
    %v173 = vadd.f32 %v69, %v172
    %v174 = vpop.f32.mrf.mxu0
    %175 = vdwg.mxu0
    %v176 = vsub.f32 0.0, %v160
    %v177 = vsub.f32 0.0, %v173
    %v178 = vmul.f32 %v176, 1.442695
    %v179 = vpow.pop %v178
    %v180 = vmul.f32 %v177, 1.442695
    %v181 = vpow.pop %v180
    %v182 = vadd.f32 %v179, 1.0
    %v183 = vadd.f32 %v181, 1.0
    %v184 = vrcp.pop %v182
    %v185 = vrcp.pop %v183
    %v186 = vmul.f32 %v185, 2.0
    %v187 = vsub.f32 %v186, 1.0
    %v188 = vmul.f32 %v184, %v187
    %v189 = vtanh.pop %v188
    %191 = vrot.lane.b32.xlu0 %v189, 64
    %v192 = vpop.permute.xlu0 %191
    %v194 = vmul.f32 %v185, %v192
    %v195 = vpack.c.bf16 %v194, %v194
    %197 = vrot.lane.b32.xlu0 %v195, 64
    %v198 = vpop.permute.xlu0 %197
    %v207 = vunpack.c.l.b16 %v57
    %v208 = vunpack.c.h.b16 %v57
    %v209 = vunpack.c.l.b16 %v58
    %v210 = vunpack.c.h.b16 %v58
    %v211 = vunpack.c.l.b16 %v59
    %v212 = vunpack.c.h.b16 %v59
    %v213 = vunpack.c.l.b16 %v60
    %v214 = vunpack.c.h.b16 %v60
    %v215 = vunpack.c.l.b16 %v61
    %v216 = vunpack.c.h.b16 %v61
    %v217 = vunpack.c.l.b16 %v62
    %v218 = vunpack.c.h.b16 %v62
    %v219 = vunpack.c.l.b16 %v63
    %v220 = vunpack.c.h.b16 %v63
    %v221 = vunpack.c.l.b16 %v64
    %v222 = vunpack.c.h.b16 %v64
    %v223 = vpack.c.b16 %v209, %v207
    %v224 = vpack.c.b16 %v210, %v208
    %v225 = vpack.c.b16 %v213, %v211
    %v226 = vpack.c.b16 %v214, %v212
    %v227 = vpack.c.b16 %v217, %v215
    %v228 = vpack.c.b16 %v218, %v216
    %v229 = vpack.c.b16 %v221, %v219
    %v230 = vpack.c.b16 %v222, %v220
    %vm239 = vcmask 523264
    %v241 = vsel %vm239, %v198, 0
    %243 = vmatpush.bf16.msra.mxu0 0
    %244 = vmatpush.bf16.msra.mxu0 0
    %245 = vmatpush.bf16.msra.mxu0 0
    %246 = vmatpush.bf16.msra.mxu0 0
    %247 = vmatpush.bf16.msra.mxu0 %v229
    %248 = vmatpush.bf16.msra.mxu0 %v227
    %249 = vmatpush.bf16.msra.mxu0 %v225
    %250 = vmatpush.bf16.msra.mxu0 %v223
    %251 = vmatmul.bf16.gmra.mxu0 %v241
    %v252 = vpop.f32.mrf.mxu0
    %v253 = vadd.f32 0.0, %v252
    %v254 = vpop.f32.mrf.mxu0
    %255 = vdwg.mxu0
    %256 = vmatpush.bf16.msra.mxu0 0
    %257 = vmatpush.bf16.msra.mxu0 0
    %258 = vmatpush.bf16.msra.mxu0 0
    %259 = vmatpush.bf16.msra.mxu0 0
    %260 = vmatpush.bf16.msra.mxu0 %v230
    %261 = vmatpush.bf16.msra.mxu0 %v228
    %262 = vmatpush.bf16.msra.mxu0 %v226
    %263 = vmatpush.bf16.msra.mxu0 %v224
    %264 = vmatmul.bf16.gmra.mxu0 %v241
    %v265 = vpop.f32.mrf.mxu0
    %v266 = vadd.f32 0.0, %v265
    %v267 = vpop.f32.mrf.mxu0
    %268 = vdwg.mxu0
    %v271 = vrot.slane %v253, 7
    %v272 = vrot.slane %v266, 7
    %v275 = vadd.f32 %v160, %v271
    %v276 = vadd.f32 %v173, %v272
    %v277 = vsub.f32 0.0, %v275
    %v278 = vsub.f32 0.0, %v276
    %v279 = vmul.f32 %v277, 1.442695
    %v280 = vpow.pop %v279
    %v281 = vmul.f32 %v278, 1.442695
    %v282 = vpow.pop %v281
    %v283 = vadd.f32 %v280, 1.0
    %v284 = vadd.f32 %v282, 1.0
    %v285 = vrcp.pop %v283
    %v286 = vrcp.pop %v284
    %v287 = vmul.f32 %v286, 2.0
    %v288 = vsub.f32 %v287, 1.0
    %v290 = vrot.slane %v188, 7
    %291 = vrot.lane.b32.xlu0 %v290, 64
    %v292 = vpop.permute.xlu0 %291
    %v294 = vmul.f32 %v285, %v292
    %v295 = vmul.f32 %v285, %v288
    %297 = vrot.lane.b32.xlu0 %v295, 64
    %v298 = vpop.permute.xlu0 %297
    %v300 = vadd.f32 %v294, %v298
    %v301 = vtanh.pop %v300
    %v302 = vmul.f32 %v286, %v301
    %v303 = vpack.c.bf16 %v302, %v302
    %v305 = vshrl.u32 %v303, 16
    %307 = vrot.lane.b32.xlu0 %v305, 64
    %v308 = vpop.permute.xlu0 %307
    %v310 = vsel %vm239, %v308, 0
    %312 = vmatpush.bf16.msra.mxu0 0
    %313 = vmatpush.bf16.msra.mxu0 0
    %314 = vmatpush.bf16.msra.mxu0 0
    %315 = vmatpush.bf16.msra.mxu0 0
    %316 = vmatpush.bf16.msra.mxu0 %v229
    %317 = vmatpush.bf16.msra.mxu0 %v227
    %318 = vmatpush.bf16.msra.mxu0 %v225
    %319 = vmatpush.bf16.msra.mxu0 %v223
    %320 = vmatmul.bf16.gmra.mxu0 %v310
    %v321 = vpop.f32.mrf.mxu0
    %v322 = vadd.f32 0.0, %v321
    %v323 = vpop.f32.mrf.mxu0
    %324 = vdwg.mxu0
    %325 = vmatpush.bf16.msra.mxu0 0
    %326 = vmatpush.bf16.msra.mxu0 0
    %327 = vmatpush.bf16.msra.mxu0 0
    %328 = vmatpush.bf16.msra.mxu0 0
    %329 = vmatpush.bf16.msra.mxu0 %v230
    %330 = vmatpush.bf16.msra.mxu0 %v228
    %331 = vmatpush.bf16.msra.mxu0 %v226
    %332 = vmatpush.bf16.msra.mxu0 %v224
    %333 = vmatmul.bf16.gmra.mxu0 %v310
    %v334 = vpop.f32.mrf.mxu0
    %v335 = vadd.f32 0.0, %v334
    %v336 = vpop.f32.mrf.mxu0
    %337 = vdwg.mxu0
    %v340 = vrot.slane %v322, 6
    %v341 = vrot.slane %v335, 6
    %v344 = vadd.f32 %v160, %v340
    %v345 = vadd.f32 %v173, %v341
    %v346 = vsub.f32 0.0, %v344
    %v347 = vsub.f32 0.0, %v345
    %v348 = vmul.f32 %v346, 1.442695
    %v349 = vpow.pop %v348
    %v350 = vmul.f32 %v347, 1.442695
    %v351 = vpow.pop %v350
    %v352 = vadd.f32 %v349, 1.0
    %v353 = vadd.f32 %v351, 1.0
    %v354 = vrcp.pop %v352
    %v355 = vrcp.pop %v353
    %v356 = vmul.f32 %v355, 2.0
    %v357 = vsub.f32 %v356, 1.0
    %v359 = vrot.slane %v300, 7
    %v361 = vmul.f32 %v354, %v359
    %v362 = vmul.f32 %v354, %v357
    %364 = vrot.lane.b32.xlu0 %v362, 64
    %v365 = vpop.permute.xlu0 %364
    %v367 = vadd.f32 %v361, %v365
    %v368 = vtanh.pop %v367
    %v369 = vmul.f32 %v355, %v368
    %v370 = vpack.c.bf16 %v369, %v369
    %v372 = vrot.slane %v370, 1
    %373 = vrot.lane.b32.xlu0 %v372, 64
    %v374 = vpop.permute.xlu0 %373
    %v376 = vsel %vm239, %v374, 0
    %378 = vmatpush.bf16.msra.mxu0 0
    %379 = vmatpush.bf16.msra.mxu0 0
    %380 = vmatpush.bf16.msra.mxu0 0
    %381 = vmatpush.bf16.msra.mxu0 0
    %382 = vmatpush.bf16.msra.mxu0 %v229
    %383 = vmatpush.bf16.msra.mxu0 %v227
    %384 = vmatpush.bf16.msra.mxu0 %v225
    %385 = vmatpush.bf16.msra.mxu0 %v223
    %386 = vmatmul.bf16.gmra.mxu0 %v376
    %v387 = vpop.f32.mrf.mxu0
    %v388 = vadd.f32 0.0, %v387
    %v389 = vpop.f32.mrf.mxu0
    %390 = vdwg.mxu0
    %391 = vmatpush.bf16.msra.mxu0 0
    %392 = vmatpush.bf16.msra.mxu0 0
    %393 = vmatpush.bf16.msra.mxu0 0
    %394 = vmatpush.bf16.msra.mxu0 0
    %395 = vmatpush.bf16.msra.mxu0 %v230
    %396 = vmatpush.bf16.msra.mxu0 %v228
    %397 = vmatpush.bf16.msra.mxu0 %v226
    %398 = vmatpush.bf16.msra.mxu0 %v224
    %399 = vmatmul.bf16.gmra.mxu0 %v376
    %v400 = vpop.f32.mrf.mxu0
    %v401 = vadd.f32 0.0, %v400
    %v402 = vpop.f32.mrf.mxu0
    %403 = vdwg.mxu0
    %v406 = vrot.slane %v388, 5
    %v407 = vrot.slane %v401, 5
    %v410 = vadd.f32 %v160, %v406
    %v411 = vadd.f32 %v173, %v407
    %v412 = vsub.f32 0.0, %v410
    %v413 = vsub.f32 0.0, %v411
    %v414 = vmul.f32 %v412, 1.442695
    %v415 = vpow.pop %v414
    %v416 = vmul.f32 %v413, 1.442695
    %v417 = vpow.pop %v416
    %v418 = vadd.f32 %v415, 1.0
    %v419 = vadd.f32 %v417, 1.0
    %v420 = vrcp.pop %v418
    %v421 = vrcp.pop %v419
    %v422 = vmul.f32 %v421, 2.0
    %v423 = vsub.f32 %v422, 1.0
    %v425 = vrot.slane %v367, 7
    %v427 = vmul.f32 %v420, %v425
    %v428 = vmul.f32 %v420, %v423
    %430 = vrot.lane.b32.xlu0 %v428, 64
    %v431 = vpop.permute.xlu0 %430
    %v433 = vadd.f32 %v427, %v431
    %v434 = vtanh.pop %v433
    %v435 = vmul.f32 %v421, %v434
    %v436 = vpack.c.bf16 %v435, %v435
    %v438 = vshrl.u32 %v436, 16
    %v440 = vrot.slane %v438, 1
    %441 = vrot.lane.b32.xlu0 %v440, 64
    %v442 = vpop.permute.xlu0 %441
    %v444 = vsel %vm239, %v442, 0
    %446 = vmatpush.bf16.msra.mxu0 0
    %447 = vmatpush.bf16.msra.mxu0 0
    %448 = vmatpush.bf16.msra.mxu0 0
    %449 = vmatpush.bf16.msra.mxu0 0
    %450 = vmatpush.bf16.msra.mxu0 %v229
    %451 = vmatpush.bf16.msra.mxu0 %v227
    %452 = vmatpush.bf16.msra.mxu0 %v225
    %453 = vmatpush.bf16.msra.mxu0 %v223
    %454 = vmatmul.bf16.gmra.mxu0 %v444
    %v455 = vpop.f32.mrf.mxu0
    %v456 = vadd.f32 0.0, %v455
    %v457 = vpop.f32.mrf.mxu0
    %458 = vdwg.mxu0
    %459 = vmatpush.bf16.msra.mxu0 0
    %460 = vmatpush.bf16.msra.mxu0 0
    %461 = vmatpush.bf16.msra.mxu0 0
    %462 = vmatpush.bf16.msra.mxu0 0
    %463 = vmatpush.bf16.msra.mxu0 %v230
    %464 = vmatpush.bf16.msra.mxu0 %v228
    %465 = vmatpush.bf16.msra.mxu0 %v226
    %466 = vmatpush.bf16.msra.mxu0 %v224
    %467 = vmatmul.bf16.gmra.mxu0 %v444
    %v468 = vpop.f32.mrf.mxu0
    %v469 = vadd.f32 0.0, %v468
    %v470 = vpop.f32.mrf.mxu0
    %471 = vdwg.mxu0
    %v474 = vrot.slane %v456, 4
    %v475 = vrot.slane %v469, 4
    %v478 = vadd.f32 %v160, %v474
    %v479 = vadd.f32 %v173, %v475
    %v480 = vsub.f32 0.0, %v478
    %v481 = vsub.f32 0.0, %v479
    %v482 = vmul.f32 %v480, 1.442695
    %v483 = vpow.pop %v482
    %v484 = vmul.f32 %v481, 1.442695
    %v485 = vpow.pop %v484
    %v486 = vadd.f32 %v483, 1.0
    %v487 = vadd.f32 %v485, 1.0
    %v488 = vrcp.pop %v486
    %v489 = vrcp.pop %v487
    %v490 = vmul.f32 %v489, 2.0
    %v491 = vsub.f32 %v490, 1.0
    %v493 = vrot.slane %v433, 7
    %v495 = vmul.f32 %v488, %v493
    %v496 = vmul.f32 %v488, %v491
    %498 = vrot.lane.b32.xlu0 %v496, 64
    %v499 = vpop.permute.xlu0 %498
    %v501 = vadd.f32 %v495, %v499
    %v502 = vtanh.pop %v501
    %v503 = vmul.f32 %v489, %v502
    %v504 = vpack.c.bf16 %v503, %v503
    %v506 = vrot.slane %v504, 2
    %507 = vrot.lane.b32.xlu0 %v506, 64
    %v508 = vpop.permute.xlu0 %507
    %v510 = vsel %vm239, %v508, 0
    %512 = vmatpush.bf16.msra.mxu0 0
    %513 = vmatpush.bf16.msra.mxu0 0
    %514 = vmatpush.bf16.msra.mxu0 0
    %515 = vmatpush.bf16.msra.mxu0 0
    %516 = vmatpush.bf16.msra.mxu0 %v229
    %517 = vmatpush.bf16.msra.mxu0 %v227
    %518 = vmatpush.bf16.msra.mxu0 %v225
    %519 = vmatpush.bf16.msra.mxu0 %v223
    %520 = vmatmul.bf16.gmra.mxu0 %v510
    %v521 = vpop.f32.mrf.mxu0
    %v522 = vadd.f32 0.0, %v521
    %v523 = vpop.f32.mrf.mxu0
    %524 = vdwg.mxu0
    %525 = vmatpush.bf16.msra.mxu0 0
    %526 = vmatpush.bf16.msra.mxu0 0
    %527 = vmatpush.bf16.msra.mxu0 0
    %528 = vmatpush.bf16.msra.mxu0 0
    %529 = vmatpush.bf16.msra.mxu0 %v230
    %530 = vmatpush.bf16.msra.mxu0 %v228
    %531 = vmatpush.bf16.msra.mxu0 %v226
    %532 = vmatpush.bf16.msra.mxu0 %v224
    %533 = vmatmul.bf16.gmra.mxu0 %v510
    %v534 = vpop.f32.mrf.mxu0
    %v535 = vadd.f32 0.0, %v534
    %v536 = vpop.f32.mrf.mxu0
    %537 = vdwg.mxu0
    %v540 = vrot.slane %v522, 3
    %v541 = vrot.slane %v535, 3
    %v544 = vadd.f32 %v160, %v540
    %v545 = vadd.f32 %v173, %v541
    %v546 = vsub.f32 0.0, %v544
    %v547 = vsub.f32 0.0, %v545
    %v548 = vmul.f32 %v546, 1.442695
    %v549 = vpow.pop %v548
    %v550 = vmul.f32 %v547, 1.442695
    %v551 = vpow.pop %v550
    %v552 = vadd.f32 %v549, 1.0
    %v553 = vadd.f32 %v551, 1.0
    %v554 = vrcp.pop %v552
    %v555 = vrcp.pop %v553
    %v556 = vmul.f32 %v555, 2.0
    %v557 = vsub.f32 %v556, 1.0
    %v559 = vrot.slane %v501, 7
    %v561 = vmul.f32 %v554, %v559
    %v562 = vmul.f32 %v554, %v557
    %564 = vrot.lane.b32.xlu0 %v562, 64
    %v565 = vpop.permute.xlu0 %564
    %v567 = vadd.f32 %v561, %v565
    %v568 = vtanh.pop %v567
    %v569 = vmul.f32 %v555, %v568
    %v570 = vpack.c.bf16 %v569, %v569
    %v572 = vshrl.u32 %v570, 16
    %v574 = vrot.slane %v572, 2
    %575 = vrot.lane.b32.xlu0 %v574, 64
    %v576 = vpop.permute.xlu0 %575
    %v578 = vsel %vm239, %v576, 0
    %580 = vmatpush.bf16.msra.mxu0 0
    %581 = vmatpush.bf16.msra.mxu0 0
    %582 = vmatpush.bf16.msra.mxu0 0
    %583 = vmatpush.bf16.msra.mxu0 0
    %584 = vmatpush.bf16.msra.mxu0 %v229
    %585 = vmatpush.bf16.msra.mxu0 %v227
    %586 = vmatpush.bf16.msra.mxu0 %v225
    %587 = vmatpush.bf16.msra.mxu0 %v223
    %588 = vmatmul.bf16.gmra.mxu0 %v578
    %v589 = vpop.f32.mrf.mxu0
    %v590 = vadd.f32 0.0, %v589
    %v591 = vpop.f32.mrf.mxu0
    %592 = vdwg.mxu0
    %593 = vmatpush.bf16.msra.mxu0 0
    %594 = vmatpush.bf16.msra.mxu0 0
    %595 = vmatpush.bf16.msra.mxu0 0
    %596 = vmatpush.bf16.msra.mxu0 0
    %597 = vmatpush.bf16.msra.mxu0 %v230
    %598 = vmatpush.bf16.msra.mxu0 %v228
    %599 = vmatpush.bf16.msra.mxu0 %v226
    %600 = vmatpush.bf16.msra.mxu0 %v224
    %601 = vmatmul.bf16.gmra.mxu0 %v578
    %v602 = vpop.f32.mrf.mxu0
    %v603 = vadd.f32 0.0, %v602
    %v604 = vpop.f32.mrf.mxu0
    %605 = vdwg.mxu0
    %v608 = vrot.slane %v590, 2
    %v609 = vrot.slane %v603, 2
    %v612 = vadd.f32 %v160, %v608
    %v613 = vadd.f32 %v173, %v609
    %v614 = vsub.f32 0.0, %v612
    %v615 = vsub.f32 0.0, %v613
    %v616 = vmul.f32 %v614, 1.442695
    %v617 = vpow.pop %v616
    %v618 = vmul.f32 %v615, 1.442695
    %v619 = vpow.pop %v618
    %v620 = vadd.f32 %v617, 1.0
    %v621 = vadd.f32 %v619, 1.0
    %v622 = vrcp.pop %v620
    %v623 = vrcp.pop %v621
    %v624 = vmul.f32 %v623, 2.0
    %v625 = vsub.f32 %v624, 1.0
    %v627 = vrot.slane %v567, 7
    %v629 = vmul.f32 %v622, %v627
    %v630 = vmul.f32 %v622, %v625
    %632 = vrot.lane.b32.xlu0 %v630, 64
    %v633 = vpop.permute.xlu0 %632
    %v635 = vadd.f32 %v629, %v633
    %v636 = vtanh.pop %v635
    %v637 = vmul.f32 %v623, %v636
    %v638 = vpack.c.bf16 %v637, %v637
    %v640 = vrot.slane %v638, 3
    %641 = vrot.lane.b32.xlu0 %v640, 64
    %v642 = vpop.permute.xlu0 %641
    %v644 = vsel %vm239, %v642, 0
    %646 = vmatpush.bf16.msra.mxu0 0
    %647 = vmatpush.bf16.msra.mxu0 0
    %648 = vmatpush.bf16.msra.mxu0 0
    %649 = vmatpush.bf16.msra.mxu0 0
    %650 = vmatpush.bf16.msra.mxu0 %v229
    %651 = vmatpush.bf16.msra.mxu0 %v227
    %652 = vmatpush.bf16.msra.mxu0 %v225
    %653 = vmatpush.bf16.msra.mxu0 %v223
    %654 = vmatmul.bf16.gmra.mxu0 %v644
    %v655 = vpop.f32.mrf.mxu0
    %v656 = vadd.f32 0.0, %v655
    %v657 = vpop.f32.mrf.mxu0
    %658 = vdwg.mxu0
    %659 = vmatpush.bf16.msra.mxu0 0
    %660 = vmatpush.bf16.msra.mxu0 0
    %661 = vmatpush.bf16.msra.mxu0 0
    %662 = vmatpush.bf16.msra.mxu0 0
    %663 = vmatpush.bf16.msra.mxu0 %v230
    %664 = vmatpush.bf16.msra.mxu0 %v228
    %665 = vmatpush.bf16.msra.mxu0 %v226
    %666 = vmatpush.bf16.msra.mxu0 %v224
    %667 = vmatmul.bf16.gmra.mxu0 %v644
    %v668 = vpop.f32.mrf.mxu0
    %v669 = vadd.f32 0.0, %v668
    %v670 = vpop.f32.mrf.mxu0
    %671 = vdwg.mxu0
    %v674 = vrot.slane %v656, 1
    %v675 = vrot.slane %v669, 1
    %v678 = vadd.f32 %v160, %v674
    %v679 = vadd.f32 %v173, %v675
    %v680 = vsub.f32 0.0, %v678
    %v681 = vsub.f32 0.0, %v679
    %v682 = vmul.f32 %v680, 1.442695
    %v683 = vpow.pop %v682
    %v684 = vmul.f32 %v681, 1.442695
    %v685 = vpow.pop %v684
    %v686 = vadd.f32 %v683, 1.0
    %v687 = vadd.f32 %v685, 1.0
    %v688 = vrcp.pop %v686
    %v689 = vrcp.pop %v687
    %v690 = vmul.f32 %v689, 2.0
    %v691 = vsub.f32 %v690, 1.0
    %v693 = vrot.slane %v635, 7
    %v695 = vmul.f32 %v688, %v693
    %v696 = vmul.f32 %v688, %v691
    %698 = vrot.lane.b32.xlu0 %v696, 64
    %v699 = vpop.permute.xlu0 %698
    %v701 = vadd.f32 %v695, %v699
    %v702 = vtanh.pop %v701
    %v703 = vmul.f32 %v689, %v702
    %v704 = vld [vmem:[%s3] sm:$0xff]
    %v705 = vld [vmem:[%s3 + $0x8] sm:$0xff]
    %v706 = vld [vmem:[%s3 + $0x10] sm:$0xff]
    %v707 = vld [vmem:[%s3 + $0x18] sm:$0xff]
    %v708 = vld [vmem:[%s3 + $0x20] sm:$0xff]
    %v709 = vld [vmem:[%s3 + $0x28] sm:$0xff]
    %v710 = vld [vmem:[%s3 + $0x30] sm:$0xff]
    %v711 = vld [vmem:[%s3 + $0x38] sm:$0xff]
    %v712 = vld [vmem:[%s3 + $0x40] sm:$0xff]
    %v713 = vld [vmem:[%s3 + $0x48] sm:$0xff]
    %v714 = vld [vmem:[%s3 + $0x50] sm:$0xff]
    %v715 = vld [vmem:[%s3 + $0x58] sm:$0xff]
    %v716 = vld [vmem:[%s3 + $0x60] sm:$0x1]
    %v717 = vmax.f32 %v703, 0.0
    %v719 = vrot.slane %v717, 7
    %720 = vrot.lane.b32.xlu0 %v719, 64
    %v721 = vpop.permute.xlu0 %720
    %v722 = vsel %vm239, %v721, 0
    %724 = vmatpush.msra.mxu0 0.0
    %725 = vmatpush.msra.mxu0 0.0
    %726 = vmatpush.msra.mxu0 0.0
    %727 = vmatpush.msra.mxu0 0.0
    %728 = vmatpush.msra.mxu0 0.0
    %729 = vmatpush.msra.mxu0 0.0
    %730 = vmatpush.msra.mxu0 0.0
    %731 = vmatpush.msra.mxu0 0.0
    %732 = vmatpush.msra.mxu0 %v711
    %733 = vmatpush.msra.mxu0 %v710
    %734 = vmatpush.msra.mxu0 %v709
    %735 = vmatpush.msra.mxu0 %v708
    %736 = vmatpush.msra.mxu0 %v707
    %737 = vmatpush.msra.mxu0 %v706
    %738 = vmatpush.msra.mxu0 %v705
    %739 = vmatpush.msra.mxu0 %v704
    %740 = vmatmul.f32.gmra.mxu0 %v722
    %v741 = vpop.f32.mrf.mxu0
    %v742 = vadd.f32 0.0, %v741
    %743 = vdwg.mxu0
    %v744 = vmax.f32 %v742, 0.0
    %vm745 = vcmask 261120
    %v747 = vsel %vm745, %v744, 0
    %749 = vmatpush.msra.mxu0 0.0
    %750 = vmatpush.msra.mxu0 0.0
    %751 = vmatpush.msra.mxu0 0.0
    %752 = vmatpush.msra.mxu0 0.0
    %753 = vmatpush.msra.mxu0 0.0
    %754 = vmatpush.msra.mxu0 0.0
    %755 = vmatpush.msra.mxu0 0.0
    %756 = vmatpush.msra.mxu0 0.0
    %757 = vmatpush.msra.mxu0 0.0
    %758 = vmatpush.msra.mxu0 0.0
    %759 = vmatpush.msra.mxu0 0.0
    %760 = vmatpush.msra.mxu0 0.0
    %761 = vmatpush.msra.mxu0 %v715
    %762 = vmatpush.msra.mxu0 %v714
    %763 = vmatpush.msra.mxu0 %v713
    %764 = vmatpush.msra.mxu0 %v712
    %765 = vmatmul.f32.gmra.mxu0 %v747
    %v766 = vpop.f32.mrf.mxu0
    %v767 = vadd.f32 %v716, %v766
    %768 = vdwg.mxu0
    %vm769 = vcmask 16384
    %770 = vst.msk [vmem:[#allocation6] sm:$0x1] %vm769, %v767
    // Predicated region
    $region22: #{tpu_custom_call.1} parent=1 // pred_check
      _
    $region23: #{tpu_custom_call.1} parent=1 // pred_check_branch
      %772 = sbr.rel (0) target = $region25
    $region24: #{tpu_custom_call.1} parent=1 // pred_region
      %774 = vsyncadd [#allocation5], 0
      %s776 = sshll.u32 [#allocation6], 4
      %s777 = int_to_ptr.vmem [resolvable:$true] %s776
      %s778 = sshll.u32 %s4, 4
      %s779 = int_to_ptr.hbm [resolvable:$true] %s778
      %781 = dma.vmem_to_hbm [thread:$0]  %s777, 16, %s779, [#allocation5]
    $region25: #{tpu_custom_call.1} parent=1 // pred_fallthru
      _
    // Predicated region
    $region26: #{tpu_custom_call.1} parent=1 // pred_check
      _
    $region27: #{tpu_custom_call.1} parent=1 // pred_check_branch
      %783 = sbr.rel (0) target = $region29
    $region28: #{tpu_custom_call.1} parent=1 // pred_region
      %785 = dma.done [#allocation5], 16
    $region29: #{tpu_custom_call.1} parent=1 // pred_fallthru
      _
    %786 = vsyncpa [#allocation4], 1
    %787 = vsyncpa [#allocation5], 1

</llo_original>
